<compile_context>
chip_gen: v5e
topology: v5e:2x2
jax: 0.10.0
libtpu: 0.0.40
codegen_flags: <defaults>
</compile_context>

<pallas_src>
import functools

import jax
import jax.numpy as jnp
from jax.experimental import pallas as pl
from jax.experimental.pallas import tpu as pltpu


def _disc_kernel(x_ref, a_ref,
                 w0_ref, b0_ref,
                 w1x_ref, w1a_ref, b1_ref,
                 w2_ref, b2_ref,
                 out_ref,
                 *, b_tile, n_points):
    # Per-grid-step shapes:
    #   x_ref  : (b_tile * n_points, S)   -- batch*points flattened into matmul M
    #   a_ref  : (b_tile, A)
    #   out_ref: (1, b_tile)              -- lane-dense, batch on the lane dim
    #   weights: full arrays resident in VMEM; b2: scalar in SMEM.

    # fc0 + tanh: one big MXU matmul over all b_tile*N rows.
    h0 = jnp.tanh(
        jnp.dot(x_ref[...], w0_ref[...], preferred_element_type=jnp.float32)
        + b0_ref[...])                                       # (b_tile*N, H1)

    # transpose + MaxPool1d(kernel=N, stride=N) over points == max over N per batch.
    h1_dim = h0.shape[-1]
    pooled = jnp.max(h0.reshape(b_tile, n_points, h1_dim), axis=1)   # (b_tile, H1)

    # fc1 on cat([pooled, a]) via split weights (avoids in-kernel concat),
    # batched over all b_tile rows.
    z = (jnp.dot(pooled, w1x_ref[...], preferred_element_type=jnp.float32)
         + jnp.dot(a_ref[...], w1a_ref[...], preferred_element_type=jnp.float32)
         + b1_ref[...])
    h1 = jnp.tanh(z)                                         # (b_tile, H2)

    # fc2 + sigmoid. Contract H2 against the (1, H2) weight row so the batch
    # dimension lands on the lane axis -> lane-dense (1, b_tile) output row.
    logit = jnp.einsum("oh,bh->ob", w2_ref[...], h1,
                       preferred_element_type=jnp.float32)   # (1, b_tile)
    out_ref[...] = jax.nn.sigmoid(logit + b2_ref[0])


def _pick_batch_tile(batch, cap=128):
    """Largest divisor of `batch` that is <= cap (keeps VMEM use bounded on v7x)."""
    t = min(batch, cap)
    while batch % t:
        t -= 1
    return t


def discriminator_forward(x, a, params, *, b_tile=None):
    """x: (B, N, S) float32, a: (B, A) float32 -> prob (B, 1)."""
    B, N, S = x.shape
    A = a.shape[-1]
    w0, b0, w1x, w1a, b1, w2, b2 = params

    if b_tile is None:
        b_tile = _pick_batch_tile(B)
    assert B % b_tile == 0
    num_tiles = B // b_tile

    # Flatten batch*points into the matmul M dimension (free, contiguous reshape).
    x2 = x.reshape(B * N, S)

    vmem_full = pl.BlockSpec(memory_space=pltpu.MemorySpace.VMEM)   # staged once
    smem_full = pl.BlockSpec(memory_space=pltpu.MemorySpace.SMEM)   # scalar bias

    kernel = functools.partial(_disc_kernel, b_tile=b_tile, n_points=N)

    out = pl.pallas_call(
        kernel,
        out_shape=jax.ShapeDtypeStruct((1, B), jnp.float32),
        grid=(num_tiles,),
        in_specs=[
            pl.BlockSpec((b_tile * N, S), lambda i: (i, 0)),   # x rows of this tile
            pl.BlockSpec((b_tile, A), lambda i: (i, 0)),       # a rows of this tile
            vmem_full,   # W0   (S, H1)
            vmem_full,   # b0   (1, H1)
            vmem_full,   # W1x  (H1, H2)
            vmem_full,   # W1a  (A, H2)
            vmem_full,   # b1   (1, H2)
            vmem_full,   # W2   (1, H2)
            smem_full,   # b2   (1,)
        ],
        out_specs=pl.BlockSpec((1, b_tile), lambda i: (0, i)),
        compiler_params=pltpu.CompilerParams(
            dimension_semantics=("parallel",)),
    )(x2, a, w0, b0, w1x, w1a, b1, w2, b2)

    return out.reshape(B, 1)


def init_params(key, S, A, H1, H2):
    """Deterministic init mimicking nn.Linear defaults (U[-1/sqrt(fan_in), 1/sqrt(fan_in)]).
    Weights stored pre-transposed as (in, out); fc2 weight kept as a (1, H2) row,
    scaled by 0.1, bias zeroed (matches the PyTorch constructor)."""
    k0, k1, k2, k3, k4 = jax.random.split(key, 5)

    def uinit(k, shape, fan_in):
        bound = 1.0 / jnp.sqrt(fan_in)
        return jax.random.uniform(k, shape, jnp.float32, -bound, bound)

    w0 = uinit(k0, (S, H1), S)
    b0 = uinit(k1, (1, H1), S)
    w1 = uinit(k2, (H1 + A, H2), H1 + A)
    b1 = uinit(k3, (1, H2), H1 + A)
    w1x, w1a = w1[:H1], w1[H1:]
    w2 = uinit(k4, (1, H2), H2) * 0.1        # fc2 weight row (out=1), *0.1
    b2 = jnp.zeros((1,), jnp.float32)        # fc2 bias zeroed
    return (w0, b0, w1x, w1a, b1, w2, b2)


def _reference(x, a, params):
    w0, b0, w1x, w1a, b1, w2, b2 = params
    h0 = jnp.tanh(jnp.einsum("bns,sh->bnh", x, w0) + b0)      # (B, N, H1)
    pooled = jnp.max(h0, axis=1)                              # (B, H1) == MaxPool1d(S)
    z = pooled @ w1x + a @ w1a + b1                           # (B, H2)
    h1 = jnp.tanh(z)
    return jax.nn.sigmoid(h1 @ w2.T + b2)                     # (B, 1)


if __name__ == "__main__":
    # Small shapes consistent with the module:
    #   num_state_inputs S = 16 (also the number of points N, so MaxPool1d(S)
    #   over the points axis yields exactly one value per channel),
    #   num_action_inputs A = 4, hidden_size_1 = 32, hidden_size_2 = 32, batch = 2.
    B, N, S, A, H1, H2 = 2, 16, 16, 4, 32, 32

    key = jax.random.PRNGKey(0)
    kx, ka, kp = jax.random.split(key, 3)
    x = jax.random.normal(kx, (B, N, S), jnp.float32)
    a = jax.random.normal(ka, (B, A), jnp.float32)
    params = init_params(kp, S, A, H1, H2)

    prob = discriminator_forward(x, a, params)
    prob = jax.block_until_ready(prob)

    ref = _reference(x, a, params)
    assert prob.shape == (B, 1)
    assert jnp.allclose(prob, ref, atol=1e-5, rtol=1e-5), (prob, ref)

    print("KERNEL_OK")
</pallas_src>

<mosaic_0001>
module attributes {stable_mosaic.version = 11 : i64} {
  func.func @_disc_kernel(%arg0: i32, %arg1: memref<32x16xf32, #tpu.memory_space<vmem>>, %arg2: memref<2x4xf32, #tpu.memory_space<vmem>>, %arg3: memref<16x32xf32, #tpu.memory_space<vmem>>, %arg4: memref<1x32xf32, #tpu.memory_space<vmem>>, %arg5: memref<32x32xf32, #tpu.memory_space<vmem>>, %arg6: memref<4x32xf32, #tpu.memory_space<vmem>>, %arg7: memref<1x32xf32, #tpu.memory_space<vmem>>, %arg8: memref<1x32xf32, #tpu.memory_space<vmem>>, %arg9: memref<1xf32, #tpu.memory_space<smem>>, %arg10: memref<1x2xf32, #tpu.memory_space<vmem>>) attributes {dimension_semantics = [#tpu.dimension_semantics<parallel>], iteration_bounds = array<i64: 1>, scalar_prefetch = 0 : i64, scratch_operands = 0 : i64, tpu.core_type = #tpu.core_type<tc>, window_params = [{transform_indices = @transform_0, window_bounds = array<i64: 32, 16>}, {transform_indices = @transform_1, window_bounds = array<i64: 2, 4>}, {pipeline_mode = #tpu.pipeline_mode<synchronous>, transform_indices = @transform_2, window_bounds = array<i64: 16, 32>}, {pipeline_mode = #tpu.pipeline_mode<synchronous>, transform_indices = @transform_3, window_bounds = array<i64: 1, 32>}, {pipeline_mode = #tpu.pipeline_mode<synchronous>, transform_indices = @transform_4, window_bounds = array<i64: 32, 32>}, {pipeline_mode = #tpu.pipeline_mode<synchronous>, transform_indices = @transform_5, window_bounds = array<i64: 4, 32>}, {pipeline_mode = #tpu.pipeline_mode<synchronous>, transform_indices = @transform_6, window_bounds = array<i64: 1, 32>}, {pipeline_mode = #tpu.pipeline_mode<synchronous>, transform_indices = @transform_7, window_bounds = array<i64: 1, 32>}, {transform_indices = @transform_8, window_bounds = array<i64: 1>}, {transform_indices = @transform_9, window_bounds = array<i64: 1, 2>}]} {
    %c0 = arith.constant 0 : index
    %c0_0 = arith.constant 0 : index
    %0 = vector.load %arg1[%c0, %c0_0] : memref<32x16xf32, #tpu.memory_space<vmem>>, vector<32x16xf32>
    %c0_1 = arith.constant 0 : index
    %c0_2 = arith.constant 0 : index
    %1 = vector.load %arg3[%c0_1, %c0_2] : memref<16x32xf32, #tpu.memory_space<vmem>>, vector<16x32xf32>
    %cst = arith.constant dense<0.000000e+00> : vector<32x32xf32>
    %2 = tpu.matmul %0, %1, %cst {dimension_numbers = #tpu.dot_dimension_numbers<[1], [0], [0], [1], [0, 0, 1, 1], [], []>} : vector<32x16xf32>, vector<16x32xf32>, vector<32x32xf32> -> vector<32x32xf32>
    %c0_3 = arith.constant 0 : index
    %c0_4 = arith.constant 0 : index
    %3 = vector.load %arg4[%c0_3, %c0_4] : memref<1x32xf32, #tpu.memory_space<vmem>>, vector<1x32xf32>
    %4 = vector.broadcast %3 : vector<1x32xf32> to vector<32x32xf32>
    %5 = arith.addf %2, %4 : vector<32x32xf32>
    %6 = math.tanh %5 : vector<32x32xf32>
    %7 = vector.shape_cast %6 : vector<32x32xf32> to vector<2x16x32xf32>
    %cst_5 = arith.constant dense<0xFF800000> : vector<2x32xf32>
    %8 = vector.multi_reduction <maximumf>, %7, %cst_5 [1] : vector<2x16x32xf32> to vector<2x32xf32>
    %c0_6 = arith.constant 0 : index
    %c0_7 = arith.constant 0 : index
    %9 = vector.load %arg5[%c0_6, %c0_7] : memref<32x32xf32, #tpu.memory_space<vmem>>, vector<32x32xf32>
    %cst_8 = arith.constant dense<0.000000e+00> : vector<2x32xf32>
    %10 = tpu.matmul %8, %9, %cst_8 {dimension_numbers = #tpu.dot_dimension_numbers<[1], [0], [0], [1], [0, 0, 1, 1], [], []>} : vector<2x32xf32>, vector<32x32xf32>, vector<2x32xf32> -> vector<2x32xf32>
    %c0_9 = arith.constant 0 : index
    %c0_10 = arith.constant 0 : index
    %11 = vector.load %arg2[%c0_9, %c0_10] : memref<2x4xf32, #tpu.memory_space<vmem>>, vector<2x4xf32>
    %c0_11 = arith.constant 0 : index
    %c0_12 = arith.constant 0 : index
    %12 = vector.load %arg6[%c0_11, %c0_12] : memref<4x32xf32, #tpu.memory_space<vmem>>, vector<4x32xf32>
    %cst_13 = arith.constant dense<0.000000e+00> : vector<2x32xf32>
    %13 = tpu.matmul %11, %12, %cst_13 {dimension_numbers = #tpu.dot_dimension_numbers<[1], [0], [0], [1], [0, 0, 1, 1], [], []>} : vector<2x4xf32>, vector<4x32xf32>, vector<2x32xf32> -> vector<2x32xf32>
    %14 = arith.addf %10, %13 : vector<2x32xf32>
    %c0_14 = arith.constant 0 : index
    %c0_15 = arith.constant 0 : index
    %15 = vector.load %arg7[%c0_14, %c0_15] : memref<1x32xf32, #tpu.memory_space<vmem>>, vector<1x32xf32>
    %16 = vector.broadcast %15 : vector<1x32xf32> to vector<2x32xf32>
    %17 = arith.addf %14, %16 : vector<2x32xf32>
    %18 = math.tanh %17 : vector<2x32xf32>
    %c0_16 = arith.constant 0 : index
    %c0_17 = arith.constant 0 : index
    %19 = vector.load %arg8[%c0_16, %c0_17] : memref<1x32xf32, #tpu.memory_space<vmem>>, vector<1x32xf32>
    "tpu.trace_start"() <{level = 10 : i32, message = "oh,bh->ob"}> : () -> ()
    %cst_18 = arith.constant dense<0.000000e+00> : vector<1x2xf32>
    %20 = tpu.matmul %19, %18, %cst_18 {dimension_numbers = #tpu.dot_dimension_numbers<[1], [1], [0], [0], [0, 0, 1, 0], [], []>} : vector<1x32xf32>, vector<2x32xf32>, vector<1x2xf32> -> vector<1x2xf32>
    "tpu.trace_stop"() : () -> ()
    %c0_19 = arith.constant 0 : index
    %21 = memref.load %arg9[%c0_19] : memref<1xf32, #tpu.memory_space<smem>>
    %22 = vector.broadcast %21 : f32 to vector<1x2xf32>
    %23 = arith.addf %20, %22 : vector<1x2xf32>
    %24 = arith.negf %23 : vector<1x2xf32>
    %25 = math.exp %24 : vector<1x2xf32>
    %cst_20 = arith.constant 1.000000e+00 : f32
    %26 = vector.broadcast %cst_20 : f32 to vector<1x2xf32>
    %27 = arith.addf %26, %25 : vector<1x2xf32>
    %28 = arith.divf %26, %27 : vector<1x2xf32>
    %c0_21 = arith.constant 0 : index
    %c0_22 = arith.constant 0 : index
    %29 = vector.load %arg10[%c0_21, %c0_22] : memref<1x2xf32, #tpu.memory_space<vmem>>, vector<1x2xf32>
    tpu.vector_store %arg10[%c0_21, %c0_22], %28 {strides = array<i32>} : memref<1x2xf32, #tpu.memory_space<vmem>>, vector<1x2xf32>,
    return
  }
  func.func @transform_0(%arg0: i32) -> (i32, i32) {
    %c0_i32 = arith.constant 0 : i32
    %c0_i32_0 = arith.constant 0 : i32
    return %arg0, %c0_i32 : i32, i32
  }
  func.func @transform_1(%arg0: i32) -> (i32, i32) {
    %c0_i32 = arith.constant 0 : i32
    %c0_i32_0 = arith.constant 0 : i32
    return %arg0, %c0_i32 : i32, i32
  }
  func.func @transform_2(%arg0: i32) -> (i32, i32) {
    %c0_i32 = arith.constant 0 : i32
    %c0_i32_0 = arith.constant 0 : i32
    %c0_i32_1 = arith.constant 0 : i32
    return %c0_i32, %c0_i32_0 : i32, i32
  }
  func.func @transform_3(%arg0: i32) -> (i32, i32) {
    %c0_i32 = arith.constant 0 : i32
    %c0_i32_0 = arith.constant 0 : i32
    %c0_i32_1 = arith.constant 0 : i32
    return %c0_i32, %c0_i32_0 : i32, i32
  }
  func.func @transform_4(%arg0: i32) -> (i32, i32) {
    %c0_i32 = arith.constant 0 : i32
    %c0_i32_0 = arith.constant 0 : i32
    %c0_i32_1 = arith.constant 0 : i32
    return %c0_i32, %c0_i32_0 : i32, i32
  }
  func.func @transform_5(%arg0: i32) -> (i32, i32) {
    %c0_i32 = arith.constant 0 : i32
    %c0_i32_0 = arith.constant 0 : i32
    %c0_i32_1 = arith.constant 0 : i32
    return %c0_i32, %c0_i32_0 : i32, i32
  }
  func.func @transform_6(%arg0: i32) -> (i32, i32) {
    %c0_i32 = arith.constant 0 : i32
    %c0_i32_0 = arith.constant 0 : i32
    %c0_i32_1 = arith.constant 0 : i32
    return %c0_i32, %c0_i32_0 : i32, i32
  }
  func.func @transform_7(%arg0: i32) -> (i32, i32) {
    %c0_i32 = arith.constant 0 : i32
    %c0_i32_0 = arith.constant 0 : i32
    %c0_i32_1 = arith.constant 0 : i32
    return %c0_i32, %c0_i32_0 : i32, i32
  }
  func.func @transform_8(%arg0: i32) -> i32 {
    %c0_i32 = arith.constant 0 : i32
    %c0_i32_0 = arith.constant 0 : i32
    return %c0_i32 : i32
  }
  func.func @transform_9(%arg0: i32) -> (i32, i32) {
    %c0_i32 = arith.constant 0 : i32
    %c0_i32_0 = arith.constant 0 : i32
    return %c0_i32, %arg0 : i32, i32
  }
}

</mosaic_0001>

<llo_original>
// kernel: tpu_custom_call.1
$region0: #{tpu_custom_call.1}
  #allocation0 [shape = 'u32[]', space=smem, size = 0x4, offset = 0x4, fixed_abs, tag = 'smem constant byte address 0x4 - core index']
  #allocation1 [shape = 'u32[72,128]{1,0:T(1,128)}', space=vmem, size = 0x9000, scoped, tag = 'internal scratch']
  #allocation2 [shape = 'f32[1]{0:T(128)S(6)}', space=smem, size = 0x200, scoped, tag = 'scoped memory for tpu_custom_call.1']
  %s0 = inlined_call_operand.vmem [shape: f32[32,16], index: 0, kind: input, shape index: {}]
  %s1 = inlined_call_operand.hbm [shape: f32[2,4], index: 1, kind: input, shape index: {}]
  %s2 = inlined_call_operand.vmem [shape: f32[16,32], index: 2, kind: input, shape index: {}]
  %s3 = inlined_call_operand.vmem [shape: f32[1,32], index: 3, kind: input, shape index: {}]
  %s4 = inlined_call_operand.vmem [shape: f32[32,32], index: 4, kind: input, shape index: {}]
  %s5 = inlined_call_operand.vmem [shape: f32[4,32], index: 5, kind: input, shape index: {}]
  %s6 = inlined_call_operand.vmem [shape: f32[1,32], index: 6, kind: input, shape index: {}]
  %s7 = inlined_call_operand.vmem [shape: f32[1,32], index: 7, kind: input, shape index: {}]
  %s8 = inlined_call_operand.<no memory space> [shape: f32[1], index: 8, kind: input, shape index: {}]
  %s9 = inlined_call_operand.hbm [shape: f32[1,2], index: 9, kind: output, shape index: {}]
  %s10 = sld [smem:[#allocation0]]
  $region50: #{tpu_custom_call.1} parent=0
    _
  %s12 = ssub.s32 1, %s10
  %s13 = scalar_select 0, %s12, %s10
  %14 = sst [smem:[#allocation2]] %s8
  $region1: #{tpu_custom_call.1} parent=0
    #allocation3 [shape = 'u8[1024]{0}', space=vmem, size = 0x400, scoped, tag = 'input window, operand 1, single buffered']
    #allocation4 [shape = 's32[1]{0}', space=sflag, size = 0x4, scoped, tag = 'scoped memory for tpu_custom_call.1']
    #allocation5 [shape = 's32[1]{0}', space=sflag, size = 0x4, scoped, tag = 'scoped memory for tpu_custom_call.1']
    #allocation6 [shape = 'u8[512]{0}', space=vmem, size = 0x400, scoped, tag = 'output window, operand 0, single buffered']
    %15 = vsyncpa [#allocation4], 0
    %16 = vsyncpa [#allocation5], 0
    // Predicated region
    $region2: #{tpu_custom_call.1} parent=1 // pred_check
      _
    $region3: #{tpu_custom_call.1} parent=1 // pred_check_branch
      %18 = sbr.rel (0) target = $region5
    $region4: #{tpu_custom_call.1} parent=1 // pred_region
      _
    $region5: #{tpu_custom_call.1} parent=1 // pred_fallthru
      _
    // Predicated region
    $region6: #{tpu_custom_call.1} parent=1 // pred_check
      _
    $region7: #{tpu_custom_call.1} parent=1 // pred_check_branch
      %20 = sbr.rel (0) target = $region9
    $region8: #{tpu_custom_call.1} parent=1 // pred_region
      %22 = vsyncadd [#allocation4], 0
      %s24 = sshll.u32 %s1, 4
      %s25 = int_to_ptr.hbm [resolvable:$true] %s24
      %s26 = sshll.u32 [#allocation3], 4
      %s27 = int_to_ptr.vmem [resolvable:$true] %s26
      %29 = dma.hbm_to_vmem [thread:$0]  %s25, 32, %s27, [#allocation4]
    $region9: #{tpu_custom_call.1} parent=1 // pred_fallthru
      _
    // Predicated region
    $region10: #{tpu_custom_call.1} parent=1 // pred_check
      _
    $region11: #{tpu_custom_call.1} parent=1 // pred_check_branch
      %31 = sbr.rel (0) target = $region13
    $region12: #{tpu_custom_call.1} parent=1 // pred_region
      _
    $region13: #{tpu_custom_call.1} parent=1 // pred_fallthru
      _
    // Predicated region
    $region14: #{tpu_custom_call.1} parent=1 // pred_check
      _
    $region15: #{tpu_custom_call.1} parent=1 // pred_check_branch
      %33 = sbr.rel (0) target = $region17
    $region16: #{tpu_custom_call.1} parent=1 // pred_region
      _
    $region17: #{tpu_custom_call.1} parent=1 // pred_fallthru
      _
    // Predicated region
    $region18: #{tpu_custom_call.1} parent=1 // pred_check
      _
    $region19: #{tpu_custom_call.1} parent=1 // pred_check_branch
      %35 = sbr.rel (0) target = $region21
    $region20: #{tpu_custom_call.1} parent=1 // pred_region
      _
    $region21: #{tpu_custom_call.1} parent=1 // pred_fallthru
      _
    // Predicated region
    $region22: #{tpu_custom_call.1} parent=1 // pred_check
      _
    $region23: #{tpu_custom_call.1} parent=1 // pred_check_branch
      %37 = sbr.rel (0) target = $region25
    $region24: #{tpu_custom_call.1} parent=1 // pred_region
      _
    $region25: #{tpu_custom_call.1} parent=1 // pred_fallthru
      _
    // Predicated region
    $region26: #{tpu_custom_call.1} parent=1 // pred_check
      _
    $region27: #{tpu_custom_call.1} parent=1 // pred_check_branch
      %39 = sbr.rel (0) target = $region29
    $region28: #{tpu_custom_call.1} parent=1 // pred_region
      _
    $region29: #{tpu_custom_call.1} parent=1 // pred_fallthru
      _
    // Predicated region
    $region30: #{tpu_custom_call.1} parent=1 // pred_check
      _
    $region31: #{tpu_custom_call.1} parent=1 // pred_check_branch
      %41 = sbr.rel (0) target = $region33
    $region32: #{tpu_custom_call.1} parent=1 // pred_region
      _
    $region33: #{tpu_custom_call.1} parent=1 // pred_fallthru
      _
    // Predicated region
    $region34: #{tpu_custom_call.1} parent=1 // pred_check
      _
    $region35: #{tpu_custom_call.1} parent=1 // pred_check_branch
      %43 = sbr.rel (0) target = $region37
    $region36: #{tpu_custom_call.1} parent=1 // pred_region
      _
    $region37: #{tpu_custom_call.1} parent=1 // pred_fallthru
      _
    // Predicated region
    $region38: #{tpu_custom_call.1} parent=1 // pred_check
      _
    $region39: #{tpu_custom_call.1} parent=1 // pred_check_branch
      %45 = sbr.rel (0) target = $region41
    $region40: #{tpu_custom_call.1} parent=1 // pred_region
      %47 = dma.done [#allocation4], 32
    $region41: #{tpu_custom_call.1} parent=1 // pred_fallthru
      _
    %v48 = vld [vmem:[%s0] sm:$0xff]
    %v49 = vld [vmem:[%s0 + $0x8] sm:$0xff]
    %v50 = vld [vmem:[%s0 + $0x10] sm:$0xff]
    %v51 = vld [vmem:[%s0 + $0x18] sm:$0xff]
    %v52 = vld [vmem:[%s2] sm:$0xff]
    %v53 = vld [vmem:[%s2 + $0x8] sm:$0xff]
    %v54 = vld [vmem:[%s3] sm:$0x1]
    %v56 = vperm.slane %v54, 0
    %vm58 = vcmask 130048
    %v60 = vsel %vm58, %v48, 0
    %v63 = vsel %vm58, %v49, 0
    %v66 = vsel %vm58, %v50, 0
    %v69 = vsel %vm58, %v51, 0
    %71 = vmatpush.msra.mxu0 0.0
    %72 = vmatpush.msra.mxu0 0.0
    %73 = vmatpush.msra.mxu0 0.0
    %74 = vmatpush.msra.mxu0 0.0
    %75 = vmatpush.msra.mxu0 0.0
    %76 = vmatpush.msra.mxu0 0.0
    %77 = vmatpush.msra.mxu0 0.0
    %78 = vmatpush.msra.mxu0 0.0
    %79 = vmatpush.msra.mxu0 0.0
    %80 = vmatpush.msra.mxu0 0.0
    %81 = vmatpush.msra.mxu0 0.0
    %82 = vmatpush.msra.mxu0 0.0
    %83 = vmatpush.msra.mxu0 0.0
    %84 = vmatpush.msra.mxu0 0.0
    %85 = vmatpush.msra.mxu0 %v53
    %86 = vmatpush.msra.mxu0 %v52
    %87 = vmatmul.f32.gmra.mxu0 %v60
    %v88 = vpop.f32.mrf.mxu0
    %v89 = vadd.f32 %v56, %v88
    %90 = vmatmul.f32.gmra.mxu0 %v63
    %v91 = vpop.f32.mrf.mxu0
    %v92 = vadd.f32 %v56, %v91
    %93 = vmatmul.f32.gmra.mxu0 %v66
    %v94 = vpop.f32.mrf.mxu0
    %v95 = vadd.f32 %v56, %v94
    %96 = vmatmul.f32.gmra.mxu0 %v69
    %v97 = vpop.f32.mrf.mxu0
    %v98 = vadd.f32 %v56, %v97
    %99 = vdwg.mxu0
    %v100 = vtanh.pop %v89
    %v101 = vtanh.pop %v92
    %v102 = vtanh.pop %v95
    %v103 = vtanh.pop %v98
    %vm104 = vcmask 261120
    %v105 = vsel %vm104, %v100, -inf
    %v106 = vsel %vm104, %v101, -inf
    %v107 = vmax.f32 %v105, %v106
    %v108 = vrot.slane %v107, 4
    %v109 = vmax.f32 %v107, %v108
    %v110 = vrot.slane %v109, 2
    %v111 = vmax.f32 %v109, %v110
    %v112 = vrot.slane %v111, 1
    %v113 = vmax.f32 %v111, %v112
    %v114 = vsel %vm104, %v102, -inf
    %v115 = vsel %vm104, %v103, -inf
    %v116 = vmax.f32 %v114, %v115
    %v117 = vrot.slane %v116, 4
    %v118 = vmax.f32 %v116, %v117
    %v119 = vrot.slane %v118, 2
    %v120 = vmax.f32 %v118, %v119
    %v121 = vrot.slane %v120, 1
    %v122 = vmax.f32 %v120, %v121
    %v123 = vld [vmem:[%s4] sm:$0xff]
    %v124 = vld [vmem:[%s4 + $0x8] sm:$0xff]
    %v125 = vld [vmem:[%s4 + $0x10] sm:$0xff]
    %v126 = vld [vmem:[%s4 + $0x18] sm:$0xff]
    %v127 = vld [vmem:[#allocation3] sm:$0x3]
    %v128 = vld [vmem:[%s5] sm:$0xf]
    %vm129 = vcmask 31744
    %v131 = vsel %vm129, %v127, 0
    %vm133 = vcmask 1043456
    %v135 = vsel %vm133, %v128, 0
    %137 = vmatpush.msra.mxu0 0.0
    %138 = vmatpush.msra.mxu0 0.0
    %139 = vmatpush.msra.mxu0 0.0
    %140 = vmatpush.msra.mxu0 0.0
    %141 = vmatpush.msra.mxu0 0.0
    %142 = vmatpush.msra.mxu0 0.0
    %143 = vmatpush.msra.mxu0 0.0
    %144 = vmatpush.msra.mxu0 0.0
    %145 = vmatpush.msra.mxu0 0.0
    %146 = vmatpush.msra.mxu0 0.0
    %147 = vmatpush.msra.mxu0 0.0
    %148 = vmatpush.msra.mxu0 0.0
    %149 = vmatpush.msra.mxu0 0.0
    %150 = vmatpush.msra.mxu0 0.0
    %151 = vmatpush.msra.mxu0 0.0
    %152 = vmatpush.msra.mxu0 %v135
    %153 = vmatmul.f32.gmra.mxu0 %v131
    %v154 = vpop.f32.mrf.mxu0
    %v155 = vadd.f32 0.0, %v154
    %156 = vdwg.mxu0
    %vm159 = vcmask 1041409
    %v160 = vsel %vm159, %v122, %v113
    %v161 = vsel %vm104, %v160, 0
    %163 = vmatpush.msra.mxu0 0.0
    %164 = vmatpush.msra.mxu0 0.0
    %165 = vmatpush.msra.mxu0 0.0
    %166 = vmatpush.msra.mxu0 0.0
    %167 = vmatpush.msra.mxu0 0.0
    %168 = vmatpush.msra.mxu0 0.0
    %169 = vmatpush.msra.mxu0 0.0
    %170 = vmatpush.msra.mxu0 0.0
    %171 = vmatpush.msra.mxu0 0.0
    %172 = vmatpush.msra.mxu0 0.0
    %173 = vmatpush.msra.mxu0 0.0
    %174 = vmatpush.msra.mxu0 0.0
    %175 = vmatpush.msra.mxu0 %v126
    %176 = vmatpush.msra.mxu0 %v125
    %177 = vmatpush.msra.mxu0 %v124
    %178 = vmatpush.msra.mxu0 %v123
    %179 = vmatmul.f32.gmra.mxu0 %v161
    %v180 = vpop.f32.mrf.mxu0
    %v181 = vadd.f32 %v155, %v180
    %182 = vdwg.mxu0
    %v183 = vld [vmem:[%s6] sm:$0x1]
    %v185 = vperm.slane %v183, 0
    %v187 = vadd.f32 %v181, %v185
    %v188 = vtanh.pop %v187
    %v189 = vld [vmem:[%s7] sm:$0x1]
    %s190 = sld [smem:[#allocation2]]
    %v191 = vstv %s190
    %v193 = vsel %vm104, %v189, 0
    %v196 = vsel %vm104, %v188, 0
    %198 = vmatpush.xpose.msra.mxu0 0.0
    %199 = vmatpush.xpose.msra.mxu0 0.0
    %200 = vmatpush.xpose.msra.mxu0 0.0
    %201 = vmatpush.xpose.msra.mxu0 0.0
    %202 = vmatpush.xpose.msra.mxu0 0.0
    %203 = vmatpush.xpose.msra.mxu0 0.0
    %204 = vmatpush.xpose.msra.mxu0 0.0
    %205 = vmatpush.xpose.msra.mxu0 0.0
    %206 = vmatpush.xpose.msra.mxu0 0.0
    %207 = vmatpush.xpose.msra.mxu0 0.0
    %208 = vmatpush.xpose.msra.mxu0 0.0
    %209 = vmatpush.xpose.msra.mxu0 0.0
    %210 = vmatpush.xpose.msra.mxu0 0.0
    %211 = vmatpush.xpose.msra.mxu0 0.0
    %212 = vmatpush.xpose.msra.mxu0 0.0
    %213 = vmatpush.xpose.msra.mxu0 %v196
    %214 = vmatmul.f32.gmra.mxu0 %v193
    %v215 = vpop.f32.mrf.mxu0
    %v216 = vadd.f32 %v191, %v215
    %217 = vdwg.mxu0
    %v218 = vxor.u32 %v216, 2147483648
    %v219 = vmul.f32 %v218, 1.442695
    %v220 = vpow.pop %v219
    %v221 = vadd.f32 %v220, 1.0
    %v222 = vrcp.pop %v221
    %v223 = vmul.f32 %v221, %v222
    %v224 = vsub.f32 1.0, %v223
    %v225 = vmul.f32 %v222, %v224
    %v226 = vadd.f32 %v222, %v225
    %vm227 = vweird.f32 %v221
    %vm228 = vweird.f32 %v222
    %vm229 = vmor %vm227, %vm228
    %v230 = vsel %vm229, %v222, %v226
    %v231 = vand.u32 2147483647, %v221
    %vm232 = vcmp.eq.f32.partialorder %v231, 8.507059e+37
    %v233 = vand.u32 %v221, 2147483648
    %v234 = vor.u32 1.1754944e-38, %v233
    %v235 = vsel %vm232, %v234, %v230
    %v236 = vmul.f32 1.0, %v235
    %vm237 = vcmask 8192
    %238 = vst.msk [vmem:[#allocation6] sm:$0x1] %vm237, %v236
    // Predicated region
    $region42: #{tpu_custom_call.1} parent=1 // pred_check
      _
    $region43: #{tpu_custom_call.1} parent=1 // pred_check_branch
      %240 = sbr.rel (0) target = $region45
    $region44: #{tpu_custom_call.1} parent=1 // pred_region
      %242 = vsyncadd [#allocation5], 0
      %s244 = sshll.u32 [#allocation6], 4
      %s245 = int_to_ptr.vmem [resolvable:$true] %s244
      %s246 = sshll.u32 %s9, 4
      %s247 = int_to_ptr.hbm [resolvable:$true] %s246
      %249 = dma.vmem_to_hbm [thread:$0]  %s245, 16, %s247, [#allocation5]
    $region45: #{tpu_custom_call.1} parent=1 // pred_fallthru
      _
    // Predicated region
    $region46: #{tpu_custom_call.1} parent=1 // pred_check
      _
    $region47: #{tpu_custom_call.1} parent=1 // pred_check_branch
      %251 = sbr.rel (0) target = $region49
    $region48: #{tpu_custom_call.1} parent=1 // pred_region
      %253 = dma.done [#allocation5], 16
    $region49: #{tpu_custom_call.1} parent=1 // pred_fallthru
      _
    %254 = vsyncpa [#allocation4], 1
    %255 = vsyncpa [#allocation5], 1

</llo_original>
